<compile_context>
chip_gen: v7x
topology: tpu7x:2x2x1
jax: 0.10.0
libtpu: 0.0.40
codegen_flags: <defaults>
</compile_context>

<pallas_src>
import functools

import jax
import jax.numpy as jnp
from jax.experimental import pallas as pl
from jax.experimental.pallas import tpu as pltpu

CLASS_NUM = 4                      # cfg.CLASS_NUM (synthetic)
NUM_ANCHORS = 3
VEC = 5 + CLASS_NUM                # [obj, tx, ty, tw, th, cls...] per anchor
COUT = NUM_ANCHORS * VEC           # 27 conv output channels
OUT_FEATS = 6 * NUM_ANCHORS        # 18 output rows: field-major (conf,x1,y1,x2,y2,cls) x 3 anchors
SCALES = ((32, 13), (16, 26), (8, 52))   # (stride, anchor/params key), fixed order
TILE = 512                         # cell tile on the 128-lane axis (sweepable)


# --------------------------------------------------------------------------
# Fused kernel: 1x1-conv head (VPU broadcast-FMA) + field-grouped box decode.
# Scalar-prefetch args:
#   sid_ref : [n_tiles]  int32 scale id per tile (selects weight/bias block)
#   st_ref  : [n_tiles]  int32 stride per tile
# Tensor args (per tile):
#   x_ref    : [Cin, T]      channel-major features, cells on lanes
#   meta_ref : [2, T]        row0 = col*stride, row1 = row*stride
#   w_ref    : [1, COUT, Cin] permuted (field-grouped) 1x1-conv weight
#   b_ref    : [1, COUT, 1]   permuted bias with log(anchor) folded into tw/th
#   o_ref    : [18, T]        rows = [conf x3 | x1 x3 | y1 x3 | x2 x3 | y2 x3 | cls x3]
# --------------------------------------------------------------------------
def _fused_head_decode_kernel(sid_ref, st_ref, x_ref, meta_ref, w_ref, b_ref,
                              o_ref):
    del sid_ref  # only used inside the index_maps
    t = st_ref[pl.program_id(0)].astype(jnp.float32)   # per-tile stride

    x = x_ref[...]                                      # [Cin, T]
    w = w_ref[0]                                        # [COUT, Cin]
    b = b_ref[0]                                        # [COUT, 1]
    cin, tile = x.shape

    # 1x1 conv as Cin (=4) broadcast-FMAs on the VPU; f32 throughout.
    acc = jnp.broadcast_to(b, (COUT, tile))
    for k in range(cin):
        acc = acc + w[:, k:k + 1] * x[k:k + 1, :]       # [COUT,1]*[1,T]

    na = NUM_ANCHORS
    # One sigmoid over [9, T]: conf | sig(tx) | sig(ty)
    sig = jax.nn.sigmoid(acc[0:3 * na, :])
    # One exp over [6, T]: box w | box h  (anchor size folded into the bias)
    ex = jnp.exp(acc[3 * na:5 * na, :])

    meta = meta_ref[...]
    colt = meta[0:1, :]                                 # col * stride
    rowt = meta[1:2, :]                                 # row * stride

    conf = sig[0:na, :]                                 # sigmoid(obj)
    cx = colt + sig[na:2 * na, :] * t                   # (col + sig(tx)) * t
    cy = rowt + sig[2 * na:3 * na, :] * t               # (row + sig(ty)) * t
    bw = ex[0:na, :]                                    # anchor_w * exp(tw)
    bh = ex[na:2 * na, :]                               # anchor_h * exp(th)
    x1 = cx - 0.5 * bw
    y1 = cy - 0.5 * bh

    # Per-anchor argmax over class logits (class-major [3, T] slabs),
    # first-max tie-break like torch.argmax.
    cbase = 5 * na
    best = acc[cbase:cbase + na, :]
    cls_idx = jnp.zeros_like(best)
    for c in range(1, CLASS_NUM):
        cand = acc[cbase + c * na:cbase + (c + 1) * na, :]
        upd = cand > best
        best = jnp.where(upd, cand, best)
        cls_idx = jnp.where(upd, jnp.float32(c), cls_idx)

    # Direct field-wise stores (no list + concatenate).
    o_ref[pl.ds(0 * na, na), :] = conf
    o_ref[pl.ds(1 * na, na), :] = x1
    o_ref[pl.ds(2 * na, na), :] = y1
    o_ref[pl.ds(3 * na, na), :] = x1 + bw
    o_ref[pl.ds(4 * na, na), :] = y1 + bh
    o_ref[pl.ds(5 * na, na), :] = cls_idx


def _fused_call(sid, stride_tbl, feat, meta, wt_all, b_all, *, tile):
    cin, mp = feat.shape
    n_tiles = mp // tile
    grid_spec = pltpu.PrefetchScalarGridSpec(
        num_scalar_prefetch=2,
        grid=(n_tiles,),
        in_specs=[
            pl.BlockSpec((cin, tile), lambda n, sid, st: (0, n)),
            pl.BlockSpec((2, tile), lambda n, sid, st: (0, n)),
            pl.BlockSpec((1, COUT, cin), lambda n, sid, st: (sid[n], 0, 0)),
            pl.BlockSpec((1, COUT, 1), lambda n, sid, st: (sid[n], 0, 0)),
        ],
        out_specs=pl.BlockSpec((OUT_FEATS, tile), lambda n, sid, st: (0, n)),
    )
    return pl.pallas_call(
        _fused_head_decode_kernel,
        out_shape=jax.ShapeDtypeStruct((OUT_FEATS, mp), jnp.float32),
        grid_spec=grid_spec,
        compiler_params=pltpu.CompilerParams(
            dimension_semantics=("parallel",)),         # v7x: shard cell tiles
    )(sid, stride_tbl, feat, meta, wt_all, b_all)


# --------------------------------------------------------------------------
# Host-side parameter prep: permute conv channels to field-grouped order and
# fold log(anchor) into the tw/th biases.
# --------------------------------------------------------------------------
def _prepare_head_params(w, b, anchors_scale):
    # Original channel order: anchor-major a*9 + [obj, tx, ty, tw, th, cls0..cls3]
    perm = []
    for f in range(5):                                  # obj, tx, ty, tw, th
        perm += [a * VEC + f for a in range(NUM_ANCHORS)]
    for c in range(CLASS_NUM):                          # class-major cls
        perm += [a * VEC + 5 + c for a in range(NUM_ANCHORS)]
    perm = jnp.array(perm, dtype=jnp.int32)

    wt = jnp.transpose(w)[perm, :]                      # [COUT, Cin], field-grouped rows
    bp = b[perm]
    log_aw = jnp.log(jnp.array([a[0] for a in anchors_scale], jnp.float32))
    log_ah = jnp.log(jnp.array([a[1] for a in anchors_scale], jnp.float32))
    bp = bp.at[3 * NUM_ANCHORS:4 * NUM_ANCHORS].add(log_aw)   # tw rows 9..11
    bp = bp.at[4 * NUM_ANCHORS:5 * NUM_ANCHORS].add(log_ah)   # th rows 12..14
    return wt, bp.reshape(COUT, 1)


def _prepare_all_params(params, anchors):
    wts, bs = [], []
    for _, key in SCALES:
        wt, bp = _prepare_head_params(params[key]["w"], params[key]["b"],
                                      anchors[key])
        wts.append(wt)
        bs.append(bp)
    return jnp.stack(wts), jnp.stack(bs)                # [3,COUT,Cin], [3,COUT,1]


# --------------------------------------------------------------------------
# Jitted wrapper: build the fused cell slab + metadata, run the kernel once,
# undo the field-grouped layout.  Returns ALL candidate boxes [sum(3*M_s), 6].
# --------------------------------------------------------------------------
@functools.partial(jax.jit, static_argnames=("tile",))
def _detector_boxes(x, wt_all, b_all, *, tile=TILE):
    B, Cin, H, W = x.shape
    slabs, metas, sids, strides, spans = [], [], [], [], []
    off = 0
    for s_idx, (stride, _) in enumerate(SCALES):
        h, wd = H // stride, W // stride
        # TODO(synk): strided average pool stands in for the Darknet-53 backbone.
        pooled = x.reshape(B, Cin, h, stride, wd, stride).mean(axis=(3, 5))
        # channel-major / cell-minor slab: cell m = b*(h*wd) + i*wd + j on lanes
        m_s = B * h * wd
        slab = jnp.transpose(pooled, (1, 0, 2, 3)).reshape(Cin, m_s)
        mp_s = pl.cdiv(m_s, tile) * tile
        slab = jnp.pad(slab, ((0, 0), (0, mp_s - m_s)))

        # per-cell metadata (col*stride, row*stride); padded lanes are dropped later
        cell = jnp.arange(mp_s, dtype=jnp.int32)
        within = cell % (h * wd)
        row = within // wd
        col = within - row * wd
        meta = jnp.stack([col.astype(jnp.float32) * float(stride),
                          row.astype(jnp.float32) * float(stride)], axis=0)

        n_t = mp_s // tile
        slabs.append(slab)
        metas.append(meta)
        sids.append(jnp.full((n_t,), s_idx, jnp.int32))
        strides.append(jnp.full((n_t,), stride, jnp.int32))
        spans.append((off, m_s))
        off += mp_s

    feat = jnp.concatenate(slabs, axis=1)               # [Cin, Mp_total]
    meta = jnp.concatenate(metas, axis=1)               # [2,   Mp_total]
    sid = jnp.concatenate(sids)
    stride_tbl = jnp.concatenate(strides)

    out_t = _fused_call(sid, stride_tbl, feat, meta, wt_all, b_all, tile=tile)

    # [18, M] field-major -> [M*3, 6] rows in (b, i, j, anchor) order, columns
    # [conf, x1, y1, x2, y2, cls] — matches the reference mask_obj.nonzero order.
    boxes_per_scale = []
    for off_s, m_s in spans:
        o = out_t[:, off_s:off_s + m_s]                 # drop per-scale lane padding
        o = jnp.transpose(o.reshape(6, NUM_ANCHORS, m_s), (2, 1, 0))
        boxes_per_scale.append(o.reshape(m_s * NUM_ANCHORS, 6))
    return jnp.concatenate(boxes_per_scale, axis=0)


def detector_forward(x, thresh, anchors, params):
    wt_all, b_all = _prepare_all_params(params, anchors)
    boxes = _detector_boxes(x, wt_all, b_all)
    # Dynamic-shape boolean filter (mask_obj.nonzero + vecs[mask]): no
    # static-shape Pallas equivalent, done eagerly in plain JAX.
    mask = boxes[:, 0] > thresh
    return boxes[mask]                                  # cat along dim 0


if __name__ == "__main__":
    key = jax.random.PRNGKey(0)
    kx, kw1, kb1, kw2, kb2, kw3, kb3 = jax.random.split(key, 7)

    B, Cin, H, W = 2, 4, 64, 64                         # strides 32/16/8 -> 2/4/8 grids
    x = jax.random.normal(kx, (B, Cin, H, W), dtype=jnp.float32)

    params = {
        13: {"w": 0.5 * jax.random.normal(kw1, (Cin, COUT), jnp.float32),
             "b": 0.1 * jax.random.normal(kb1, (COUT,), jnp.float32)},
        26: {"w": 0.5 * jax.random.normal(kw2, (Cin, COUT), jnp.float32),
             "b": 0.1 * jax.random.normal(kb2, (COUT,), jnp.float32)},
        52: {"w": 0.5 * jax.random.normal(kw3, (Cin, COUT), jnp.float32),
             "b": 0.1 * jax.random.normal(kb3, (COUT,), jnp.float32)},
    }
    anchors = {
        13: [[40.0, 30.0], [48.0, 40.0], [56.0, 50.0]],
        26: [[20.0, 16.0], [24.0, 20.0], [30.0, 24.0]],
        52: [[8.0, 6.0], [12.0, 10.0], [16.0, 12.0]],
    }
    thresh = 0.5

    boxes = detector_forward(x, thresh, anchors, params)
    jax.block_until_ready(boxes)
    assert boxes.ndim == 2 and boxes.shape[1] == 6
    print("KERNEL_OK")
</pallas_src>

<mosaic_0001>
module attributes {stable_mosaic.version = 11 : i64} {
  func.func @_fused_head_decode_kernel(%arg0: i32, %arg1: memref<3xi32, #tpu.memory_space<smem>>, %arg2: memref<3xi32, #tpu.memory_space<smem>>, %arg3: memref<4x512xf32, #tpu.memory_space<vmem>>, %arg4: memref<2x512xf32, #tpu.memory_space<vmem>>, %arg5: memref<1x27x4xf32, #tpu.memory_space<vmem>>, %arg6: memref<1x27x1xf32, #tpu.memory_space<vmem>>, %arg7: memref<18x512xf32, #tpu.memory_space<vmem>>) attributes {dimension_semantics = [#tpu.dimension_semantics<parallel>], iteration_bounds = array<i64: 3>, scalar_prefetch = 2 : i64, scratch_operands = 0 : i64, tpu.core_type = #tpu.core_type<tc>, window_params = [{transform_indices = @transform_0, window_bounds = array<i64: 4, 512>}, {transform_indices = @transform_1, window_bounds = array<i64: 2, 512>}, {transform_indices = @transform_2, window_bounds = array<i64: 1, 27, 4>}, {transform_indices = @transform_3, window_bounds = array<i64: 1, 27, 1>}, {transform_indices = @transform_4, window_bounds = array<i64: 18, 512>}]} {
    %0 = arith.index_cast %arg0 : i32 to index
    %1 = memref.load %arg2[%0] : memref<3xi32, #tpu.memory_space<smem>>
    %2 = arith.sitofp %1 : i32 to f32
    %c0 = arith.constant 0 : index
    %c0_0 = arith.constant 0 : index
    %3 = vector.load %arg3[%c0, %c0_0] : memref<4x512xf32, #tpu.memory_space<vmem>>, vector<4x512xf32>
    %c0_1 = arith.constant 0 : index
    %c0_2 = arith.constant 0 : index
    %c0_3 = arith.constant 0 : index
    %4 = vector.load %arg5[%c0_1, %c0_2, %c0_3] : memref<1x27x4xf32, #tpu.memory_space<vmem>>, vector<1x27x4xf32>
    %5 = vector.shape_cast %4 : vector<1x27x4xf32> to vector<27x4xf32>
    %c0_4 = arith.constant 0 : index
    %c0_5 = arith.constant 0 : index
    %c0_6 = arith.constant 0 : index
    %6 = vector.load %arg6[%c0_4, %c0_5, %c0_6] : memref<1x27x1xf32, #tpu.memory_space<vmem>>, vector<1x27x1xf32>
    %7 = vector.shape_cast %6 : vector<1x27x1xf32> to vector<27x1xf32>
    %8 = vector.shape_cast %7 : vector<27x1xf32> to vector<27x1xf32>
    %9 = vector.broadcast %8 : vector<27x1xf32> to vector<27x512xf32>
    %10 = vector.extract_strided_slice %5 {offsets = [0, 0], sizes = [27, 1], strides = [1, 1]} : vector<27x4xf32> to vector<27x1xf32>
    %11 = vector.extract_strided_slice %3 {offsets = [0, 0], sizes = [1, 512], strides = [1, 1]} : vector<4x512xf32> to vector<1x512xf32>
    %12 = vector.broadcast %10 : vector<27x1xf32> to vector<27x512xf32>
    %13 = vector.broadcast %11 : vector<1x512xf32> to vector<27x512xf32>
    %14 = arith.mulf %12, %13 : vector<27x512xf32>
    %15 = arith.addf %9, %14 : vector<27x512xf32>
    %16 = vector.extract_strided_slice %5 {offsets = [0, 1], sizes = [27, 1], strides = [1, 1]} : vector<27x4xf32> to vector<27x1xf32>
    %17 = vector.extract_strided_slice %3 {offsets = [1, 0], sizes = [1, 512], strides = [1, 1]} : vector<4x512xf32> to vector<1x512xf32>
    %18 = vector.broadcast %16 : vector<27x1xf32> to vector<27x512xf32>
    %19 = vector.broadcast %17 : vector<1x512xf32> to vector<27x512xf32>
    %20 = arith.mulf %18, %19 : vector<27x512xf32>
    %21 = arith.addf %15, %20 : vector<27x512xf32>
    %22 = vector.extract_strided_slice %5 {offsets = [0, 2], sizes = [27, 1], strides = [1, 1]} : vector<27x4xf32> to vector<27x1xf32>
    %23 = vector.extract_strided_slice %3 {offsets = [2, 0], sizes = [1, 512], strides = [1, 1]} : vector<4x512xf32> to vector<1x512xf32>
    %24 = vector.broadcast %22 : vector<27x1xf32> to vector<27x512xf32>
    %25 = vector.broadcast %23 : vector<1x512xf32> to vector<27x512xf32>
    %26 = arith.mulf %24, %25 : vector<27x512xf32>
    %27 = arith.addf %21, %26 : vector<27x512xf32>
    %28 = vector.extract_strided_slice %5 {offsets = [0, 3], sizes = [27, 1], strides = [1, 1]} : vector<27x4xf32> to vector<27x1xf32>
    %29 = vector.extract_strided_slice %3 {offsets = [3, 0], sizes = [1, 512], strides = [1, 1]} : vector<4x512xf32> to vector<1x512xf32>
    %30 = vector.broadcast %28 : vector<27x1xf32> to vector<27x512xf32>
    %31 = vector.broadcast %29 : vector<1x512xf32> to vector<27x512xf32>
    %32 = arith.mulf %30, %31 : vector<27x512xf32>
    %33 = arith.addf %27, %32 : vector<27x512xf32>
    %34 = vector.extract_strided_slice %33 {offsets = [0, 0], sizes = [9, 512], strides = [1, 1]} : vector<27x512xf32> to vector<9x512xf32>
    %35 = arith.negf %34 : vector<9x512xf32>
    %36 = math.exp %35 : vector<9x512xf32>
    %cst = arith.constant 1.000000e+00 : f32
    %37 = vector.broadcast %cst : f32 to vector<9x512xf32>
    %38 = arith.addf %37, %36 : vector<9x512xf32>
    %39 = arith.divf %37, %38 : vector<9x512xf32>
    %40 = vector.extract_strided_slice %33 {offsets = [9, 0], sizes = [6, 512], strides = [1, 1]} : vector<27x512xf32> to vector<6x512xf32>
    %41 = math.exp %40 : vector<6x512xf32>
    %c0_7 = arith.constant 0 : index
    %c0_8 = arith.constant 0 : index
    %42 = vector.load %arg4[%c0_7, %c0_8] : memref<2x512xf32, #tpu.memory_space<vmem>>, vector<2x512xf32>
    %43 = vector.extract_strided_slice %42 {offsets = [0, 0], sizes = [1, 512], strides = [1, 1]} : vector<2x512xf32> to vector<1x512xf32>
    %44 = vector.extract_strided_slice %42 {offsets = [1, 0], sizes = [1, 512], strides = [1, 1]} : vector<2x512xf32> to vector<1x512xf32>
    %45 = vector.extract_strided_slice %39 {offsets = [0, 0], sizes = [3, 512], strides = [1, 1]} : vector<9x512xf32> to vector<3x512xf32>
    %46 = vector.extract_strided_slice %39 {offsets = [3, 0], sizes = [3, 512], strides = [1, 1]} : vector<9x512xf32> to vector<3x512xf32>
    %47 = vector.broadcast %2 : f32 to vector<3x512xf32>
    %48 = arith.mulf %46, %47 : vector<3x512xf32>
    %49 = vector.broadcast %43 : vector<1x512xf32> to vector<3x512xf32>
    %50 = arith.addf %49, %48 : vector<3x512xf32>
    %51 = vector.extract_strided_slice %39 {offsets = [6, 0], sizes = [3, 512], strides = [1, 1]} : vector<9x512xf32> to vector<3x512xf32>
    %52 = vector.broadcast %2 : f32 to vector<3x512xf32>
    %53 = arith.mulf %51, %52 : vector<3x512xf32>
    %54 = vector.broadcast %44 : vector<1x512xf32> to vector<3x512xf32>
    %55 = arith.addf %54, %53 : vector<3x512xf32>
    %56 = vector.extract_strided_slice %41 {offsets = [0, 0], sizes = [3, 512], strides = [1, 1]} : vector<6x512xf32> to vector<3x512xf32>
    %57 = vector.extract_strided_slice %41 {offsets = [3, 0], sizes = [3, 512], strides = [1, 1]} : vector<6x512xf32> to vector<3x512xf32>
    %cst_9 = arith.constant 5.000000e-01 : f32
    %58 = vector.broadcast %cst_9 : f32 to vector<3x512xf32>
    %59 = arith.mulf %58, %56 : vector<3x512xf32>
    %60 = arith.subf %50, %59 : vector<3x512xf32>
    %cst_10 = arith.constant 5.000000e-01 : f32
    %61 = vector.broadcast %cst_10 : f32 to vector<3x512xf32>
    %62 = arith.mulf %61, %57 : vector<3x512xf32>
    %63 = arith.subf %55, %62 : vector<3x512xf32>
    %64 = vector.extract_strided_slice %33 {offsets = [15, 0], sizes = [3, 512], strides = [1, 1]} : vector<27x512xf32> to vector<3x512xf32>
    %cst_11 = arith.constant 0.000000e+00 : f32
    %65 = vector.broadcast %cst_11 : f32 to vector<3x512xf32>
    %66 = vector.extract_strided_slice %33 {offsets = [18, 0], sizes = [3, 512], strides = [1, 1]} : vector<27x512xf32> to vector<3x512xf32>
    %67 = arith.cmpf ogt, %66, %64 : vector<3x512xf32>
    %68 = arith.select %67, %66, %64 : vector<3x512xi1>, vector<3x512xf32>
    %cst_12 = arith.constant 1.000000e+00 : f32
    %69 = vector.broadcast %cst_12 : f32 to vector<3x512xf32>
    %70 = arith.select %67, %69, %65 : vector<3x512xi1>, vector<3x512xf32>
    %71 = vector.extract_strided_slice %33 {offsets = [21, 0], sizes = [3, 512], strides = [1, 1]} : vector<27x512xf32> to vector<3x512xf32>
    %72 = arith.cmpf ogt, %71, %68 : vector<3x512xf32>
    %73 = arith.select %72, %71, %68 : vector<3x512xi1>, vector<3x512xf32>
    %cst_13 = arith.constant 2.000000e+00 : f32
    %74 = vector.broadcast %cst_13 : f32 to vector<3x512xf32>
    %75 = arith.select %72, %74, %70 : vector<3x512xi1>, vector<3x512xf32>
    %76 = vector.extract_strided_slice %33 {offsets = [24, 0], sizes = [3, 512], strides = [1, 1]} : vector<27x512xf32> to vector<3x512xf32>
    %77 = arith.cmpf ogt, %76, %73 : vector<3x512xf32>
    %cst_14 = arith.constant 3.000000e+00 : f32
    %78 = vector.broadcast %cst_14 : f32 to vector<3x512xf32>
    %79 = arith.select %77, %78, %75 : vector<3x512xi1>, vector<3x512xf32>
    %c0_15 = arith.constant 0 : index
    %c0_16 = arith.constant 0 : index
    %80 = vector.load %arg7[%c0_15, %c0_16] : memref<18x512xf32, #tpu.memory_space<vmem>>, vector<3x512xf32>
    tpu.vector_store %arg7[%c0_15, %c0_16], %45 {strides = array<i32>} : memref<18x512xf32, #tpu.memory_space<vmem>>, vector<3x512xf32>,
    %c3 = arith.constant 3 : index
    %c0_17 = arith.constant 0 : index
    %81 = vector.load %arg7[%c3, %c0_17] : memref<18x512xf32, #tpu.memory_space<vmem>>, vector<3x512xf32>
    tpu.vector_store %arg7[%c3, %c0_17], %60 {strides = array<i32>} : memref<18x512xf32, #tpu.memory_space<vmem>>, vector<3x512xf32>,
    %c6 = arith.constant 6 : index
    %c0_18 = arith.constant 0 : index
    %82 = vector.load %arg7[%c6, %c0_18] : memref<18x512xf32, #tpu.memory_space<vmem>>, vector<3x512xf32>
    tpu.vector_store %arg7[%c6, %c0_18], %63 {strides = array<i32>} : memref<18x512xf32, #tpu.memory_space<vmem>>, vector<3x512xf32>,
    %83 = arith.addf %60, %56 : vector<3x512xf32>
    %c9 = arith.constant 9 : index
    %c0_19 = arith.constant 0 : index
    %84 = vector.load %arg7[%c9, %c0_19] : memref<18x512xf32, #tpu.memory_space<vmem>>, vector<3x512xf32>
    tpu.vector_store %arg7[%c9, %c0_19], %83 {strides = array<i32>} : memref<18x512xf32, #tpu.memory_space<vmem>>, vector<3x512xf32>,
    %85 = arith.addf %63, %57 : vector<3x512xf32>
    %c12 = arith.constant 12 : index
    %c0_20 = arith.constant 0 : index
    %86 = vector.load %arg7[%c12, %c0_20] : memref<18x512xf32, #tpu.memory_space<vmem>>, vector<3x512xf32>
    tpu.vector_store %arg7[%c12, %c0_20], %85 {strides = array<i32>} : memref<18x512xf32, #tpu.memory_space<vmem>>, vector<3x512xf32>,
    %c15 = arith.constant 15 : index
    %c0_21 = arith.constant 0 : index
    %87 = vector.load %arg7[%c15, %c0_21] : memref<18x512xf32, #tpu.memory_space<vmem>>, vector<3x512xf32>
    tpu.vector_store %arg7[%c15, %c0_21], %79 {strides = array<i32>} : memref<18x512xf32, #tpu.memory_space<vmem>>, vector<3x512xf32>,
    return
  }
  func.func @transform_0(%arg0: i32, %arg1: memref<3xi32, #tpu.memory_space<smem>>, %arg2: memref<3xi32, #tpu.memory_space<smem>>) -> (i32, i32) {
    %c0_i32 = arith.constant 0 : i32
    %c0_i32_0 = arith.constant 0 : i32
    return %c0_i32, %arg0 : i32, i32
  }
  func.func @transform_1(%arg0: i32, %arg1: memref<3xi32, #tpu.memory_space<smem>>, %arg2: memref<3xi32, #tpu.memory_space<smem>>) -> (i32, i32) {
    %c0_i32 = arith.constant 0 : i32
    %c0_i32_0 = arith.constant 0 : i32
    return %c0_i32, %arg0 : i32, i32
  }
  func.func @transform_2(%arg0: i32, %arg1: memref<3xi32, #tpu.memory_space<smem>>, %arg2: memref<3xi32, #tpu.memory_space<smem>>) -> (i32, i32, i32) {
    %0 = arith.index_cast %arg0 : i32 to index
    %1 = memref.load %arg1[%0] : memref<3xi32, #tpu.memory_space<smem>>
    %c0_i32 = arith.constant 0 : i32
    %c0_i32_0 = arith.constant 0 : i32
    %c0_i32_1 = arith.constant 0 : i32
    return %1, %c0_i32, %c0_i32_0 : i32, i32, i32
  }
  func.func @transform_3(%arg0: i32, %arg1: memref<3xi32, #tpu.memory_space<smem>>, %arg2: memref<3xi32, #tpu.memory_space<smem>>) -> (i32, i32, i32) {
    %0 = arith.index_cast %arg0 : i32 to index
    %1 = memref.load %arg1[%0] : memref<3xi32, #tpu.memory_space<smem>>
    %c0_i32 = arith.constant 0 : i32
    %c0_i32_0 = arith.constant 0 : i32
    %c0_i32_1 = arith.constant 0 : i32
    return %1, %c0_i32, %c0_i32_0 : i32, i32, i32
  }
  func.func @transform_4(%arg0: i32, %arg1: memref<3xi32, #tpu.memory_space<smem>>, %arg2: memref<3xi32, #tpu.memory_space<smem>>) -> (i32, i32) {
    %c0_i32 = arith.constant 0 : i32
    %c0_i32_0 = arith.constant 0 : i32
    return %c0_i32, %arg0 : i32, i32
  }
}

</mosaic_0001>

<llo_original>
// kernel: _detector_boxes.1
$region0: #{_detector_boxes.1}
  #allocation0 [shape = 'u32[]', space=smem, size = 0x4, offset = 0x4, fixed_abs, tag = 'smem constant byte address 0x4 - core index']
  #allocation1 [shape = 'u32[144,128]{1,0:T(1,128)}', space=vmem, size = 0x12000, scoped, tag = 'internal scratch']
  #allocation2 [shape = 's32[1]{0}', space=sflag, size = 0x4, scoped, tag = 'scoped memory for _detector_boxes.1']
  #allocation3 [shape = 'u8[512]{0}', space=smem, size = 0x200, scoped, tag = 'prefetched SMEM operand 0']
  #allocation4 [shape = 'u8[512]{0}', space=smem, size = 0x200, scoped, tag = 'prefetched SMEM operand 1']
  %s0 = inlined_call_operand.vmem [shape: s32[3], index: 0, kind: input, shape index: {}]
  %s1 = inlined_call_operand.vmem [shape: s32[3], index: 1, kind: input, shape index: {}]
  %s2 = inlined_call_operand.vmem [shape: f32[4,1536], index: 2, kind: input, shape index: {}]
  %s3 = inlined_call_operand.vmem [shape: f32[2,1536], index: 3, kind: input, shape index: {}]
  %s4 = inlined_call_operand.vmem [shape: f32[3,27,4], index: 4, kind: input, shape index: {}]
  %s5 = inlined_call_operand.vmem [shape: f32[3,27,1], index: 5, kind: input, shape index: {}]
  %s6 = inlined_call_operand.vmem [shape: f32[18,1536], index: 6, kind: output, shape index: {}]
  %s7 = sld [smem:[#allocation0]]
  $region68: #{_detector_boxes.1} parent=0
    _
  %s9 = ssub.s32 1, %s7
  %s10 = scalar_select 0, %s9, %s7
  %s11 = sshll.u32 %s0, 4
  %s12 = int_to_ptr.vmem [resolvable:$true] %s11
  %14 = dma.vmem_to_smem %s12, 16, [#allocation3], [#allocation2]
  %s15 = sshll.u32 %s1, 4
  %s16 = int_to_ptr.vmem [resolvable:$true] %s15
  %18 = dma.vmem_to_smem %s16, 16, [#allocation4], [#allocation2]
  %19 = dma.done [#allocation2], 32
  %20 = sfence
  $region1: #{_detector_boxes.1} parent=0
    #allocation5 [shape = 'u8[98304]{0}', space=vmem, size = 0x18000, scoped, tag = 'output window, operand 0']
    loop: start=0, step=1, limit=5
    $region2: #{_detector_boxes.1} parent=1 // loop_pre_header
      _
    $region3: #{_detector_boxes.1} parent=1 // loop_header
      %s22 = sphi 0, %s26
      %p23 = scmp.ge.s32.totalorder %s22, 5
      %s32 = sphi 0, %s34
      %s35 = sphi 0, %s32
      %s36 = sphi 0, %s35
      %s52 = sphi 0, %s36
      %s58 = sphi 0, %s60
      %s61 = sphi 0, %s58
      %s62 = sphi 0, %s61
      %s78 = sphi 0, %s62
      %s86 = sphi 0, %s88
      %s89 = sphi 0, %s86
      %s90 = sphi 0, %s89
      %s106 = sphi 0, %s90
      %s114 = sphi 0, %s116
      %s117 = sphi 0, %s114
      %s118 = sphi 0, %s117
      %s134 = sphi 0, %s118
      %s140 = sphi 0, %s142
      %s143 = sphi 0, %s140
      %s144 = sphi 0, %s143
      %s160 = sphi 0, %s144
    $region4: #{_detector_boxes.1} parent=1 // loop_header_branch
      %25 = sbr.rel (%p23) target = $region8
    $region5: #{_detector_boxes.1} parent=1 // loop_body
      %s27 = ssub.s32 %s22, 1
      %s28 = ssub.s32 %s22, 2
      %s29 = sadd.s32 %s22, 1
      %s30 = ssub.s32 %s22, %s29
      %p31 = scmp.eq.s32.totalorder %s30, 0
      %s33 = sadd.s32 %s32, 1
      %s34 = scalar_select %p31, %s32, %s33
      %p37 = pneg %p31
      %p38 = scmp.eq.s32.totalorder %s22, 2
      %p39 = por %p37, %p38
      %p40 = scmp.ne.s32.totalorder %s32, %s35
      %p41 = scmp.eq.s32.totalorder %s22, 0
      %p42 = por %p40, %p41
      %p43 = scmp.ne.s32.totalorder %s32, %s35
      %p44 = scmp.eq.s32.totalorder %s27, 2
      %p45 = por %p43, %p44
      %p46 = scmp.ne.s32.totalorder %s35, %s36
      %p47 = scmp.eq.s32.totalorder %s27, 0
      %p48 = por %p46, %p47
      %p49 = scmp.ne.s32.totalorder %s35, %s36
      %p50 = scmp.eq.s32.totalorder %s28, 2
      %p51 = por %p49, %p50
      %p53 = scmp.ne.s32.totalorder %s36, %s52
      %p54 = scmp.eq.s32.totalorder %s28, 0
      %p55 = por %p53, %p54
      %s56 = ssub.s32 %s22, %s29
      %p57 = scmp.eq.s32.totalorder %s56, 0
      %s59 = sadd.s32 %s58, 1
      %s60 = scalar_select %p57, %s58, %s59
      %p63 = pneg %p57
      %p64 = scmp.eq.s32.totalorder %s22, 2
      %p65 = por %p63, %p64
      %p66 = scmp.ne.s32.totalorder %s58, %s61
      %p67 = scmp.eq.s32.totalorder %s22, 0
      %p68 = por %p66, %p67
      %p69 = scmp.ne.s32.totalorder %s58, %s61
      %p70 = scmp.eq.s32.totalorder %s27, 2
      %p71 = por %p69, %p70
      %p72 = scmp.ne.s32.totalorder %s61, %s62
      %p73 = scmp.eq.s32.totalorder %s27, 0
      %p74 = por %p72, %p73
      %p75 = scmp.ne.s32.totalorder %s61, %s62
      %p76 = scmp.eq.s32.totalorder %s28, 2
      %p77 = por %p75, %p76
      %p79 = scmp.ne.s32.totalorder %s62, %s78
      %p80 = scmp.eq.s32.totalorder %s28, 0
      %p81 = por %p79, %p80
      %s82 = sld [smem:[#allocation3 + %s22]]
      %s83 = sld [smem:[#allocation3 + %s29]]
      %s84 = ssub.s32 %s82, %s83
      %p85 = scmp.eq.s32.totalorder %s84, 0
      %s87 = sadd.s32 %s86, 1
      %s88 = scalar_select %p85, %s86, %s87
      %p91 = pneg %p85
      %p92 = scmp.eq.s32.totalorder %s22, 2
      %p93 = por %p91, %p92
      %p94 = scmp.ne.s32.totalorder %s86, %s89
      %p95 = scmp.eq.s32.totalorder %s22, 0
      %p96 = por %p94, %p95
      %p97 = scmp.ne.s32.totalorder %s86, %s89
      %p98 = scmp.eq.s32.totalorder %s27, 2
      %p99 = por %p97, %p98
      %p100 = scmp.ne.s32.totalorder %s89, %s90
      %p101 = scmp.eq.s32.totalorder %s27, 0
      %p102 = por %p100, %p101
      %p103 = scmp.ne.s32.totalorder %s89, %s90
      %p104 = scmp.eq.s32.totalorder %s28, 2
      %p105 = por %p103, %p104
      %p107 = scmp.ne.s32.totalorder %s90, %s106
      %p108 = scmp.eq.s32.totalorder %s28, 0
      %p109 = por %p107, %p108
      %s110 = sld [smem:[#allocation3 + %s22]]
      %s111 = sld [smem:[#allocation3 + %s29]]
      %s112 = ssub.s32 %s110, %s111
      %p113 = scmp.eq.s32.totalorder %s112, 0
      %s115 = sadd.s32 %s114, 1
      %s116 = scalar_select %p113, %s114, %s115
      %p119 = pneg %p113
      %p120 = scmp.eq.s32.totalorder %s22, 2
      %p121 = por %p119, %p120
      %p122 = scmp.ne.s32.totalorder %s114, %s117
      %p123 = scmp.eq.s32.totalorder %s22, 0
      %p124 = por %p122, %p123
      %p125 = scmp.ne.s32.totalorder %s114, %s117
      %p126 = scmp.eq.s32.totalorder %s27, 2
      %p127 = por %p125, %p126
      %p128 = scmp.ne.s32.totalorder %s117, %s118
      %p129 = scmp.eq.s32.totalorder %s27, 0
      %p130 = por %p128, %p129
      %p131 = scmp.ne.s32.totalorder %s117, %s118
      %p132 = scmp.eq.s32.totalorder %s28, 2
      %p133 = por %p131, %p132
      %p135 = scmp.ne.s32.totalorder %s118, %s134
      %p136 = scmp.eq.s32.totalorder %s28, 0
      %p137 = por %p135, %p136
      %s138 = ssub.s32 %s22, %s29
      %p139 = scmp.eq.s32.totalorder %s138, 0
      %s141 = sadd.s32 %s140, 1
      %s142 = scalar_select %p139, %s140, %s141
      %p145 = pneg %p139
      %p146 = scmp.eq.s32.totalorder %s22, 2
      %p147 = por %p145, %p146
      %p148 = scmp.ne.s32.totalorder %s140, %s143
      %p149 = scmp.eq.s32.totalorder %s22, 0
      %p150 = por %p148, %p149
      %p151 = scmp.ne.s32.totalorder %s140, %s143
      %p152 = scmp.eq.s32.totalorder %s27, 2
      %p153 = por %p151, %p152
      %p154 = scmp.ne.s32.totalorder %s143, %s144
      %p155 = scmp.eq.s32.totalorder %s27, 0
      %p156 = por %p154, %p155
      %p157 = scmp.ne.s32.totalorder %s143, %s144
      %p158 = scmp.eq.s32.totalorder %s28, 2
      %p159 = por %p157, %p158
      %p161 = scmp.ne.s32.totalorder %s144, %s160
      %p162 = scmp.eq.s32.totalorder %s28, 0
      %p163 = por %p161, %p162
      %p164 = scmp.le.s32.totalorder 1, %s22
      %p165 = scmp.lt.s32.totalorder %s22, 4
      %p166 = pnand %p164, %p165
      %p167 = pneg %p166
      // Predicated region
      $region9: #{_detector_boxes.1} parent=5 // pred_check
        _
      $region10: #{_detector_boxes.1} parent=5 // pred_check_branch
        %169 = sbr.rel (%p166) target = $region12
      $region11: #{_detector_boxes.1} parent=5 // pred_region
        %s170 = ssub.s32 %s22, 1
      $region12: #{_detector_boxes.1} parent=5 // pred_fallthru
        _
      %p171 = scmp.lt.s32.totalorder %s22, 3
      // Predicated region
      $region13: #{_detector_boxes.1} parent=5 // pred_check
        %p172 = pneg %p171
      $region14: #{_detector_boxes.1} parent=5 // pred_check_branch
        %174 = sbr.rel (%p172) target = $region16
      $region15: #{_detector_boxes.1} parent=5 // pred_region
        // Predicated region
        $region17: #{_detector_boxes.1} parent=15 // pred_check
          %p175 = pneg %p42
        $region18: #{_detector_boxes.1} parent=15 // pred_check_branch
          %177 = sbr.rel (%p175) target = $region20
        $region19: #{_detector_boxes.1} parent=15 // pred_region
          %s178 = smul.u32 4, %s22
          %p179 = scmp.lt.s32.totalorder %s178, 11
          %s180 = scalar_select %p179, %s178, 11
          %s181 = smul.addr %s180, 4
          %s182 = scalar_lea.vmem %s2, %s181
          %s183 = smul.u32 4, %s22
        $region20: #{_detector_boxes.1} parent=15 // pred_fallthru
          _
        // Predicated region
        $region21: #{_detector_boxes.1} parent=15 // pred_check
          %p184 = pneg %p68
        $region22: #{_detector_boxes.1} parent=15 // pred_check_branch
          %186 = sbr.rel (%p184) target = $region24
        $region23: #{_detector_boxes.1} parent=15 // pred_region
          %s187 = smul.u32 4, %s22
          %p188 = scmp.lt.s32.totalorder %s187, 11
          %s189 = scalar_select %p188, %s187, 11
          %s190 = smul.addr %s189, 2
          %s191 = scalar_lea.vmem %s3, %s190
          %s192 = smul.u32 4, %s22
        $region24: #{_detector_boxes.1} parent=15 // pred_fallthru
          _
        // Predicated region
        $region25: #{_detector_boxes.1} parent=15 // pred_check
          %p193 = pneg %p96
        $region26: #{_detector_boxes.1} parent=15 // pred_check_branch
          %195 = sbr.rel (%p193) target = $region28
        $region27: #{_detector_boxes.1} parent=15 // pred_region
          %s196 = sld [smem:[#allocation3 + %s22]]
          %p197 = scmp.lt.s32.totalorder %s196, 2
          %s198 = scalar_select %p197, %s196, 2
          %s199 = smul.addr %s198, 4
          %s200 = smul.addr %s199, 8
          %s201 = scalar_lea.vmem %s4, %s200
          %s202 = sld [smem:[#allocation3 + %s22]]
        $region28: #{_detector_boxes.1} parent=15 // pred_fallthru
          _
        // Predicated region
        $region29: #{_detector_boxes.1} parent=15 // pred_check
          %p203 = pneg %p124
        $region30: #{_detector_boxes.1} parent=15 // pred_check_branch
          %205 = sbr.rel (%p203) target = $region32
        $region31: #{_detector_boxes.1} parent=15 // pred_region
          %s206 = sld [smem:[#allocation3 + %s22]]
          %p207 = scmp.lt.s32.totalorder %s206, 2
          %s208 = scalar_select %p207, %s206, 2
          %s209 = smul.addr %s208, 4
          %s210 = smul.addr %s209, 8
          %s211 = scalar_lea.vmem %s5, %s210
          %s212 = sld [smem:[#allocation3 + %s22]]
        $region32: #{_detector_boxes.1} parent=15 // pred_fallthru
          _
      $region16: #{_detector_boxes.1} parent=5 // pred_fallthru
        _
      %p213 = scmp.le.s32.totalorder 1, %s22
      %p214 = scmp.lt.s32.totalorder %s22, 4
      %p215 = pnand %p213, %p214
      %p216 = pneg %p215
      // Predicated region
      $region33: #{_detector_boxes.1} parent=5 // pred_check
        _
      $region34: #{_detector_boxes.1} parent=5 // pred_check_branch
        %218 = sbr.rel (%p215) target = $region36
      $region35: #{_detector_boxes.1} parent=5 // pred_region
        %s219 = ssub.s32 %s22, 1
        %s220 = smul.u32 4, %s27
        %p221 = scmp.lt.s32.totalorder %s220, 11
        %s222 = scalar_select %p221, %s220, 11
        %s223 = smul.addr %s222, 4
        %s224 = scalar_lea.vmem %s2, %s223
        %p225 = pneg %p48
        %p226 = pneg %p45
        %s227 = smul.u32 4, %s27
        %p228 = scmp.lt.s32.totalorder %s227, 11
        %s229 = scalar_select %p228, %s227, 11
        %s230 = smul.addr %s229, 2
        %s231 = scalar_lea.vmem %s3, %s230
        %p232 = pneg %p74
        %p233 = pneg %p71
        %s234 = sld [smem:[#allocation3 + %s27]]
        %p235 = scmp.lt.s32.totalorder %s234, 2
        %s236 = scalar_select %p235, %s234, 2
        %s237 = smul.addr %s236, 4
        %s238 = smul.addr %s237, 8
        %s239 = scalar_lea.vmem %s4, %s238
        %p240 = pneg %p102
        %p241 = pneg %p99
        %s242 = sld [smem:[#allocation3 + %s27]]
        %p243 = scmp.lt.s32.totalorder %s242, 2
        %s244 = scalar_select %p243, %s242, 2
        %s245 = smul.addr %s244, 4
        %s246 = smul.addr %s245, 8
        %s247 = scalar_lea.vmem %s5, %s246
        %p248 = pneg %p130
        %p249 = pneg %p127
        %p250 = pneg %p156
        %p251 = pneg %p153
        %s252 = sand.u32 %s143, 1
        %s253 = sand.u32 %s143, 1
        %s254 = smul.addr %s253, 96
        %s255 = scalar_lea.vmem [#allocation5], %s254
        %s256 = smul.u32 4, %s27
        %p257 = scmp.lt.s32.totalorder %s256, 11
        %s258 = scalar_select %p257, %s256, 11
        %s259 = smul.addr %s258, 4
        %s260 = scalar_lea.vmem %s2, %s259
        %s261 = smul.u32 4, %s27
        %s262 = smul.u32 4, %s27
        %p263 = scmp.lt.s32.totalorder %s262, 11
        %s264 = scalar_select %p263, %s262, 11
        %s265 = smul.addr %s264, 2
        %s266 = scalar_lea.vmem %s3, %s265
        %s267 = smul.u32 4, %s27
        %s268 = sld [smem:[#allocation3 + %s27]]
        %p269 = scmp.lt.s32.totalorder %s268, 2
        %s270 = scalar_select %p269, %s268, 2
        %s271 = smul.addr %s270, 4
        %s272 = smul.addr %s271, 8
        %s273 = scalar_lea.vmem %s4, %s272
        %s274 = sld [smem:[#allocation3 + %s27]]
        %s275 = sld [smem:[#allocation3 + %s27]]
        %p276 = scmp.lt.s32.totalorder %s275, 2
        %s277 = scalar_select %p276, %s275, 2
        %s278 = smul.addr %s277, 4
        %s279 = smul.addr %s278, 8
        %s280 = scalar_lea.vmem %s5, %s279
        %s281 = sld [smem:[#allocation3 + %s27]]
        %s282 = smul.u32 4, %s27
        %s283 = sld [smem:[#allocation4 + %s27]]
        %s284 = scvt.s32.f32 %s283
        %v285 = vld [vmem:[%s260] sm:$0xff]
        %v286 = vld [vmem:[%s260 + $0x8] sm:$0xff]
        %v287 = vld [vmem:[%s273] sm:$0xff]
        %v288 = vld [vmem:[%s273 + $0x8] sm:$0xff]
        %v289 = vld [vmem:[%s273 + $0x10] sm:$0xff]
        %v290 = vld [vmem:[%s273 + $0x18] sm:$0x7]
        %v291 = vld [vmem:[%s280] sm:$0xff]
        %v292 = vld [vmem:[%s280 + $0x8] sm:$0xff]
        %v293 = vld [vmem:[%s280 + $0x10] sm:$0xff]
        %v294 = vld [vmem:[%s280 + $0x18] sm:$0x7]
        %296 = vset.pattern.permute.xlu0 0
        %297 = vperm.xlu0 %296, %v291
        %v298 = vpop.permute.xlu0 %297
        %301 = vset.pattern.permute.xlu0 0
        %302 = vperm.xlu0 %301, %v292
        %v303 = vpop.permute.xlu0 %302
        %306 = vset.pattern.permute.xlu0 0
        %307 = vperm.xlu0 %306, %v293
        %v308 = vpop.permute.xlu0 %307
        %311 = vset.pattern.permute.xlu0 0
        %312 = vperm.xlu0 %311, %v294
        %v313 = vpop.permute.xlu0 %312
        %316 = vset.pattern.permute.xlu0 0
        %317 = vperm.xlu0 %316, %v287
        %v318 = vpop.permute.xlu0 %317
        %321 = vset.pattern.permute.xlu0 0
        %322 = vperm.xlu0 %321, %v288
        %v323 = vpop.permute.xlu0 %322
        %326 = vset.pattern.permute.xlu0 0
        %327 = vperm.xlu0 %326, %v289
        %v328 = vpop.permute.xlu0 %327
        %331 = vset.pattern.permute.xlu0 0
        %332 = vperm.xlu0 %331, %v290
        %v333 = vpop.permute.xlu0 %332
        %v337 = vlaneseq
        %v338 = vshrl.u32 %v337, 7
        %v339 = vsub.s32 0, %v338
        %v340 = vrot.slane %v285, %v339
        %v341 = vlaneseq
        %v342 = vshrl.u32 %v341, 7
        %v343 = vsub.s32 4, %v342
        %v344 = vrot.slane %v285, %v343
        %v345 = vlaneseq
        %v346 = vshrl.u32 %v345, 7
        %v347 = vsub.s32 0, %v346
        %v348 = vrot.slane %v286, %v347
        %v349 = vlaneseq
        %v350 = vshrl.u32 %v349, 7
        %v351 = vsub.s32 4, %v350
        %v352 = vrot.slane %v286, %v351
        %v357 = vlaneseq
        %v358 = vshrl.u32 %v357, 7
        %v359 = vsub.s32 0, %v358
        %v360 = vrot.slane %v340, %v359
        %v361 = vlaneseq
        %v362 = vshrl.u32 %v361, 7
        %v363 = vsub.s32 0, %v362
        %v364 = vrot.slane %v344, %v363
        %v365 = vlaneseq
        %v366 = vshrl.u32 %v365, 7
        %v367 = vsub.s32 0, %v366
        %v368 = vrot.slane %v348, %v367
        %v369 = vlaneseq
        %v370 = vshrl.u32 %v369, 7
        %v371 = vsub.s32 0, %v370
        %v372 = vrot.slane %v352, %v371
        %v373 = vmul.f32 %v318, %v360
        %v374 = vmul.f32 %v318, %v364
        %v375 = vmul.f32 %v318, %v368
        %v376 = vmul.f32 %v318, %v372
        %v377 = vmul.f32 %v323, %v360
        %v378 = vmul.f32 %v323, %v364
        %v379 = vmul.f32 %v323, %v368
        %v380 = vmul.f32 %v323, %v372
        %v381 = vmul.f32 %v328, %v360
        %v382 = vmul.f32 %v328, %v364
        %v383 = vmul.f32 %v328, %v368
        %v384 = vmul.f32 %v328, %v372
        %v385 = vmul.f32 %v333, %v360
        %v386 = vmul.f32 %v333, %v364
        %v387 = vmul.f32 %v333, %v368
        %v388 = vmul.f32 %v333, %v372
        %v389 = vadd.f32 %v298, %v373
        %v390 = vadd.f32 %v298, %v374
        %v391 = vadd.f32 %v298, %v375
        %v392 = vadd.f32 %v298, %v376
        %v393 = vadd.f32 %v303, %v377
        %v394 = vadd.f32 %v303, %v378
        %v395 = vadd.f32 %v303, %v379
        %v396 = vadd.f32 %v303, %v380
        %v397 = vadd.f32 %v308, %v381
        %v398 = vadd.f32 %v308, %v382
        %v399 = vadd.f32 %v308, %v383
        %v400 = vadd.f32 %v308, %v384
        %v401 = vadd.f32 %v313, %v385
        %v402 = vadd.f32 %v313, %v386
        %v403 = vadd.f32 %v313, %v387
        %v404 = vadd.f32 %v313, %v388
        %405 = vset.pattern.permute.xlu0 1
        %406 = vperm.xlu0 %405, %v287
        %v407 = vpop.permute.xlu0 %406
        %409 = vset.pattern.permute.xlu0 1
        %410 = vperm.xlu0 %409, %v288
        %v411 = vpop.permute.xlu0 %410
        %413 = vset.pattern.permute.xlu0 1
        %414 = vperm.xlu0 %413, %v289
        %v415 = vpop.permute.xlu0 %414
        %417 = vset.pattern.permute.xlu0 1
        %418 = vperm.xlu0 %417, %v290
        %v419 = vpop.permute.xlu0 %418
        %v421 = vlaneseq
        %v422 = vshrl.u32 %v421, 7
        %v423 = vsub.s32 1, %v422
        %v424 = vrot.slane %v285, %v423
        %v425 = vlaneseq
        %v426 = vshrl.u32 %v425, 7
        %v427 = vsub.s32 5, %v426
        %v428 = vrot.slane %v285, %v427
        %v429 = vlaneseq
        %v430 = vshrl.u32 %v429, 7
        %v431 = vsub.s32 1, %v430
        %v432 = vrot.slane %v286, %v431
        %v433 = vlaneseq
        %v434 = vshrl.u32 %v433, 7
        %v435 = vsub.s32 5, %v434
        %v436 = vrot.slane %v286, %v435
        %v441 = vlaneseq
        %v442 = vshrl.u32 %v441, 7
        %v443 = vsub.s32 1, %v442
        %v444 = vrot.slane %v424, %v443
        %v445 = vlaneseq
        %v446 = vshrl.u32 %v445, 7
        %v447 = vsub.s32 1, %v446
        %v448 = vrot.slane %v428, %v447
        %v449 = vlaneseq
        %v450 = vshrl.u32 %v449, 7
        %v451 = vsub.s32 1, %v450
        %v452 = vrot.slane %v432, %v451
        %v453 = vlaneseq
        %v454 = vshrl.u32 %v453, 7
        %v455 = vsub.s32 1, %v454
        %v456 = vrot.slane %v436, %v455
        %v457 = vmul.f32 %v407, %v444
        %v458 = vmul.f32 %v407, %v448
        %v459 = vmul.f32 %v407, %v452
        %v460 = vmul.f32 %v407, %v456
        %v461 = vmul.f32 %v411, %v444
        %v462 = vmul.f32 %v411, %v448
        %v463 = vmul.f32 %v411, %v452
        %v464 = vmul.f32 %v411, %v456
        %v465 = vmul.f32 %v415, %v444
        %v466 = vmul.f32 %v415, %v448
        %v467 = vmul.f32 %v415, %v452
        %v468 = vmul.f32 %v415, %v456
        %v469 = vmul.f32 %v419, %v444
        %v470 = vmul.f32 %v419, %v448
        %v471 = vmul.f32 %v419, %v452
        %v472 = vmul.f32 %v419, %v456
        %v473 = vadd.f32 %v389, %v457
        %v474 = vadd.f32 %v390, %v458
        %v475 = vadd.f32 %v391, %v459
        %v476 = vadd.f32 %v392, %v460
        %v477 = vadd.f32 %v393, %v461
        %v478 = vadd.f32 %v394, %v462
        %v479 = vadd.f32 %v395, %v463
        %v480 = vadd.f32 %v396, %v464
        %v481 = vadd.f32 %v397, %v465
        %v482 = vadd.f32 %v398, %v466
        %v483 = vadd.f32 %v399, %v467
        %v484 = vadd.f32 %v400, %v468
        %v485 = vadd.f32 %v401, %v469
        %v486 = vadd.f32 %v402, %v470
        %v487 = vadd.f32 %v403, %v471
        %v488 = vadd.f32 %v404, %v472
        %489 = vset.pattern.permute.xlu0 2
        %490 = vperm.xlu0 %489, %v287
        %v491 = vpop.permute.xlu0 %490
        %493 = vset.pattern.permute.xlu0 2
        %494 = vperm.xlu0 %493, %v288
        %v495 = vpop.permute.xlu0 %494
        %497 = vset.pattern.permute.xlu0 2
        %498 = vperm.xlu0 %497, %v289
        %v499 = vpop.permute.xlu0 %498
        %501 = vset.pattern.permute.xlu0 2
        %502 = vperm.xlu0 %501, %v290
        %v503 = vpop.permute.xlu0 %502
        %v505 = vlaneseq
        %v506 = vshrl.u32 %v505, 7
        %v507 = vsub.s32 2, %v506
        %v508 = vrot.slane %v285, %v507
        %v509 = vlaneseq
        %v510 = vshrl.u32 %v509, 7
        %v511 = vsub.s32 6, %v510
        %v512 = vrot.slane %v285, %v511
        %v513 = vlaneseq
        %v514 = vshrl.u32 %v513, 7
        %v515 = vsub.s32 2, %v514
        %v516 = vrot.slane %v286, %v515
        %v517 = vlaneseq
        %v518 = vshrl.u32 %v517, 7
        %v519 = vsub.s32 6, %v518
        %v520 = vrot.slane %v286, %v519
        %v525 = vlaneseq
        %v526 = vshrl.u32 %v525, 7
        %v527 = vsub.s32 2, %v526
        %v528 = vrot.slane %v508, %v527
        %v529 = vlaneseq
        %v530 = vshrl.u32 %v529, 7
        %v531 = vsub.s32 2, %v530
        %v532 = vrot.slane %v512, %v531
        %v533 = vlaneseq
        %v534 = vshrl.u32 %v533, 7
        %v535 = vsub.s32 2, %v534
        %v536 = vrot.slane %v516, %v535
        %v537 = vlaneseq
        %v538 = vshrl.u32 %v537, 7
        %v539 = vsub.s32 2, %v538
        %v540 = vrot.slane %v520, %v539
        %v541 = vmul.f32 %v491, %v528
        %v542 = vmul.f32 %v491, %v532
        %v543 = vmul.f32 %v491, %v536
        %v544 = vmul.f32 %v491, %v540
        %v545 = vmul.f32 %v495, %v528
        %v546 = vmul.f32 %v495, %v532
        %v547 = vmul.f32 %v495, %v536
        %v548 = vmul.f32 %v495, %v540
        %v549 = vmul.f32 %v499, %v528
        %v550 = vmul.f32 %v499, %v532
        %v551 = vmul.f32 %v499, %v536
        %v552 = vmul.f32 %v499, %v540
        %v553 = vmul.f32 %v503, %v528
        %v554 = vmul.f32 %v503, %v532
        %v555 = vmul.f32 %v503, %v536
        %v556 = vmul.f32 %v503, %v540
        %v557 = vadd.f32 %v473, %v541
        %v558 = vadd.f32 %v474, %v542
        %v559 = vadd.f32 %v475, %v543
        %v560 = vadd.f32 %v476, %v544
        %v561 = vadd.f32 %v477, %v545
        %v562 = vadd.f32 %v478, %v546
        %v563 = vadd.f32 %v479, %v547
        %v564 = vadd.f32 %v480, %v548
        %v565 = vadd.f32 %v481, %v549
        %v566 = vadd.f32 %v482, %v550
        %v567 = vadd.f32 %v483, %v551
        %v568 = vadd.f32 %v484, %v552
        %v569 = vadd.f32 %v485, %v553
        %v570 = vadd.f32 %v486, %v554
        %v571 = vadd.f32 %v487, %v555
        %v572 = vadd.f32 %v488, %v556
        %573 = vset.pattern.permute.xlu0 3
        %574 = vperm.xlu0 %573, %v287
        %v575 = vpop.permute.xlu0 %574
        %577 = vset.pattern.permute.xlu0 3
        %578 = vperm.xlu0 %577, %v288
        %v579 = vpop.permute.xlu0 %578
        %581 = vset.pattern.permute.xlu0 3
        %582 = vperm.xlu0 %581, %v289
        %v583 = vpop.permute.xlu0 %582
        %585 = vset.pattern.permute.xlu0 3
        %586 = vperm.xlu0 %585, %v290
        %v587 = vpop.permute.xlu0 %586
        %v589 = vlaneseq
        %v590 = vshrl.u32 %v589, 7
        %v591 = vsub.s32 3, %v590
        %v592 = vrot.slane %v285, %v591
        %v593 = vlaneseq
        %v594 = vshrl.u32 %v593, 7
        %v595 = vsub.s32 7, %v594
        %v596 = vrot.slane %v285, %v595
        %v597 = vlaneseq
        %v598 = vshrl.u32 %v597, 7
        %v599 = vsub.s32 3, %v598
        %v600 = vrot.slane %v286, %v599
        %v601 = vlaneseq
        %v602 = vshrl.u32 %v601, 7
        %v603 = vsub.s32 7, %v602
        %v604 = vrot.slane %v286, %v603
        %v609 = vlaneseq
        %v610 = vshrl.u32 %v609, 7
        %v611 = vsub.s32 3, %v610
        %v612 = vrot.slane %v592, %v611
        %v613 = vlaneseq
        %v614 = vshrl.u32 %v613, 7
        %v615 = vsub.s32 3, %v614
        %v616 = vrot.slane %v596, %v615
        %v617 = vlaneseq
        %v618 = vshrl.u32 %v617, 7
        %v619 = vsub.s32 3, %v618
        %v620 = vrot.slane %v600, %v619
        %v621 = vlaneseq
        %v622 = vshrl.u32 %v621, 7
        %v623 = vsub.s32 3, %v622
        %v624 = vrot.slane %v604, %v623
        %v625 = vmul.f32 %v575, %v612
        %v626 = vmul.f32 %v575, %v616
        %v627 = vmul.f32 %v575, %v620
        %v628 = vmul.f32 %v575, %v624
        %v629 = vmul.f32 %v579, %v612
        %v630 = vmul.f32 %v579, %v616
        %v631 = vmul.f32 %v579, %v620
        %v632 = vmul.f32 %v579, %v624
        %v633 = vmul.f32 %v583, %v612
        %v634 = vmul.f32 %v583, %v616
        %v635 = vmul.f32 %v583, %v620
        %v636 = vmul.f32 %v583, %v624
        %v637 = vmul.f32 %v587, %v612
        %v638 = vmul.f32 %v587, %v616
        %v639 = vmul.f32 %v587, %v620
        %v640 = vmul.f32 %v587, %v624
        %v641 = vadd.f32 %v557, %v625
        %v642 = vadd.f32 %v558, %v626
        %v643 = vadd.f32 %v559, %v627
        %v644 = vadd.f32 %v560, %v628
        %v645 = vadd.f32 %v561, %v629
        %v646 = vadd.f32 %v562, %v630
        %v647 = vadd.f32 %v563, %v631
        %v648 = vadd.f32 %v564, %v632
        %v649 = vadd.f32 %v565, %v633
        %v650 = vadd.f32 %v566, %v634
        %v651 = vadd.f32 %v567, %v635
        %v652 = vadd.f32 %v568, %v636
        %v653 = vadd.f32 %v569, %v637
        %v654 = vadd.f32 %v570, %v638
        %v655 = vadd.f32 %v571, %v639
        %v656 = vadd.f32 %v572, %v640
        %v657 = vxor.u32 %v641, 2147483648
        %v658 = vxor.u32 %v642, 2147483648
        %v659 = vxor.u32 %v643, 2147483648
        %v660 = vxor.u32 %v644, 2147483648
        %v661 = vxor.u32 %v645, 2147483648
        %v662 = vxor.u32 %v646, 2147483648
        %v663 = vxor.u32 %v647, 2147483648
        %v664 = vxor.u32 %v648, 2147483648
        %v665 = vmul.f32 %v657, 1.442695
        %v666 = vpow.pop %v665
        %v667 = vmul.f32 %v658, 1.442695
        %v668 = vpow.pop %v667
        %v669 = vmul.f32 %v659, 1.442695
        %v670 = vpow.pop %v669
        %v671 = vmul.f32 %v660, 1.442695
        %v672 = vpow.pop %v671
        %v673 = vmul.f32 %v661, 1.442695
        %v674 = vpow.pop %v673
        %v675 = vmul.f32 %v662, 1.442695
        %v676 = vpow.pop %v675
        %v677 = vmul.f32 %v663, 1.442695
        %v678 = vpow.pop %v677
        %v679 = vmul.f32 %v664, 1.442695
        %v680 = vpow.pop %v679
        %v681 = vadd.f32 %v666, 1.0
        %v682 = vadd.f32 %v668, 1.0
        %v683 = vadd.f32 %v670, 1.0
        %v684 = vadd.f32 %v672, 1.0
        %v685 = vadd.f32 %v674, 1.0
        %v686 = vadd.f32 %v676, 1.0
        %v687 = vadd.f32 %v678, 1.0
        %v688 = vadd.f32 %v680, 1.0
        %v689 = vrcp.pop %v681
        %v690 = vmul.f32 1.0, %v689
        %v691 = vrcp.pop %v682
        %v692 = vmul.f32 1.0, %v691
        %v693 = vrcp.pop %v683
        %v694 = vmul.f32 1.0, %v693
        %v695 = vrcp.pop %v684
        %v696 = vmul.f32 1.0, %v695
        %v697 = vrcp.pop %v685
        %v698 = vmul.f32 1.0, %v697
        %v699 = vrcp.pop %v686
        %v700 = vmul.f32 1.0, %v699
        %v701 = vrcp.pop %v687
        %v702 = vmul.f32 1.0, %v701
        %v703 = vrcp.pop %v688
        %v704 = vmul.f32 1.0, %v703
        %v705 = vmul.f32 %v645, 1.442695
        %v706 = vpow.pop %v705
        %v707 = vmul.f32 %v646, 1.442695
        %v708 = vpow.pop %v707
        %v709 = vmul.f32 %v647, 1.442695
        %v710 = vpow.pop %v709
        %v711 = vmul.f32 %v648, 1.442695
        %v712 = vpow.pop %v711
        %v713 = vld [vmem:[%s266] sm:$0xff]
        %v714 = vstv %s284
        %v715 = vmul.f32 %v690, %v714
        %v716 = vmul.f32 %v692, %v714
        %v717 = vmul.f32 %v694, %v714
        %v718 = vmul.f32 %v696, %v714
        %v720 = vlaneseq
        %v721 = vshrl.u32 %v720, 7
        %v722 = vsub.s32 0, %v721
        %v723 = vrot.slane %v713, %v722
        %v724 = vlaneseq
        %v725 = vshrl.u32 %v724, 7
        %v726 = vsub.s32 2, %v725
        %v727 = vrot.slane %v713, %v726
        %v728 = vlaneseq
        %v729 = vshrl.u32 %v728, 7
        %v730 = vsub.s32 4, %v729
        %v731 = vrot.slane %v713, %v730
        %v732 = vlaneseq
        %v733 = vshrl.u32 %v732, 7
        %v734 = vsub.s32 6, %v733
        %v735 = vrot.slane %v713, %v734
        %v740 = vlaneseq
        %v741 = vshrl.u32 %v740, 7
        %v742 = vsub.s32 0, %v741
        %v743 = vrot.slane %v723, %v742
        %v744 = vlaneseq
        %v745 = vshrl.u32 %v744, 7
        %v746 = vsub.s32 0, %v745
        %v747 = vrot.slane %v727, %v746
        %v748 = vlaneseq
        %v749 = vshrl.u32 %v748, 7
        %v750 = vsub.s32 0, %v749
        %v751 = vrot.slane %v731, %v750
        %v752 = vlaneseq
        %v753 = vshrl.u32 %v752, 7
        %v754 = vsub.s32 0, %v753
        %v755 = vrot.slane %v735, %v754
        %v756 = vadd.f32 %v743, %v715
        %v757 = vadd.f32 %v747, %v716
        %v758 = vadd.f32 %v751, %v717
        %v759 = vadd.f32 %v755, %v718
        %v760 = vmul.f32 %v698, %v714
        %v761 = vmul.f32 %v700, %v714
        %v762 = vmul.f32 %v702, %v714
        %v763 = vmul.f32 %v704, %v714
        %v764 = vlaneseq
        %v765 = vshrl.u32 %v764, 7
        %v766 = vsub.s32 1, %v765
        %v767 = vrot.slane %v713, %v766
        %v768 = vlaneseq
        %v769 = vshrl.u32 %v768, 7
        %v770 = vsub.s32 3, %v769
        %v771 = vrot.slane %v713, %v770
        %v772 = vlaneseq
        %v773 = vshrl.u32 %v772, 7
        %v774 = vsub.s32 5, %v773
        %v775 = vrot.slane %v713, %v774
        %v776 = vlaneseq
        %v777 = vshrl.u32 %v776, 7
        %v778 = vsub.s32 7, %v777
        %v779 = vrot.slane %v713, %v778
        %v784 = vlaneseq
        %v785 = vshrl.u32 %v784, 7
        %v786 = vsub.s32 1, %v785
        %v787 = vrot.slane %v767, %v786
        %v788 = vlaneseq
        %v789 = vshrl.u32 %v788, 7
        %v790 = vsub.s32 1, %v789
        %v791 = vrot.slane %v771, %v790
        %v792 = vlaneseq
        %v793 = vshrl.u32 %v792, 7
        %v794 = vsub.s32 1, %v793
        %v795 = vrot.slane %v775, %v794
        %v796 = vlaneseq
        %v797 = vshrl.u32 %v796, 7
        %v798 = vsub.s32 1, %v797
        %v799 = vrot.slane %v779, %v798
        %v800 = vadd.f32 %v787, %v715
        %v801 = vadd.f32 %v791, %v716
        %v802 = vadd.f32 %v795, %v717
        %v803 = vadd.f32 %v799, %v718
        %v804 = vadd.f32 %v787, %v760
        %v805 = vadd.f32 %v791, %v761
        %v806 = vadd.f32 %v795, %v762
        %v807 = vadd.f32 %v799, %v763
        %v808 = vmul.f32 %v706, 0.5
        %v809 = vmul.f32 %v708, 0.5
        %v810 = vmul.f32 %v710, 0.5
        %v811 = vmul.f32 %v712, 0.5
        %v816 = vrot.slane %v808, 6
        %v817 = vrot.slane %v809, 6
        %v818 = vrot.slane %v810, 6
        %v819 = vrot.slane %v811, 6
        %v824 = vsub.f32 %v756, %v816
        %v825 = vsub.f32 %v757, %v817
        %v826 = vsub.f32 %v758, %v818
        %v827 = vsub.f32 %v759, %v819
        %v828 = vsub.f32 %v800, %v816
        %v829 = vsub.f32 %v801, %v817
        %v830 = vsub.f32 %v802, %v818
        %v831 = vsub.f32 %v803, %v819
        %v832 = vsub.f32 %v804, %v816
        %v833 = vsub.f32 %v805, %v817
        %v834 = vsub.f32 %v806, %v818
        %v835 = vsub.f32 %v807, %v819
        %vm844 = vcmask 1042432
        %v845 = vrot.slane %v645, 5
        %v846 = vrot.slane %v649, 5
        %v847 = vsel %vm844, %v845, %v846
        %v848 = vrot.slane %v646, 5
        %v849 = vrot.slane %v650, 5
        %v850 = vsel %vm844, %v848, %v849
        %v851 = vrot.slane %v647, 5
        %v852 = vrot.slane %v651, 5
        %v853 = vsel %vm844, %v851, %v852
        %v854 = vrot.slane %v648, 5
        %v855 = vrot.slane %v652, 5
        %v856 = vsel %vm844, %v854, %v855
        %vm861 = vcmp.gt.f32.partialorder %v649, %v847
        %vm862 = vcmp.gt.f32.partialorder %v650, %v850
        %vm863 = vcmp.gt.f32.partialorder %v651, %v853
        %vm864 = vcmp.gt.f32.partialorder %v652, %v856
        %v865 = vsel %vm861, %v649, %v847
        %v866 = vsel %vm862, %v650, %v850
        %v867 = vsel %vm863, %v651, %v853
        %v868 = vsel %vm864, %v652, %v856
        %v869 = vsel %vm861, 1.0, 0.0
        %v870 = vsel %vm862, 1.0, 0.0
        %v871 = vsel %vm863, 1.0, 0.0
        %v872 = vsel %vm864, 1.0, 0.0
        %v877 = vrot.slane %v865, 5
        %v878 = vrot.slane %v866, 5
        %v879 = vrot.slane %v867, 5
        %v880 = vrot.slane %v868, 5
        %vm885 = vcmp.gt.f32.partialorder %v649, %v877
        %vm886 = vcmp.gt.f32.partialorder %v650, %v878
        %vm887 = vcmp.gt.f32.partialorder %v651, %v879
        %vm888 = vcmp.gt.f32.partialorder %v652, %v880
        %v889 = vsel %vm885, %v649, %v877
        %v890 = vsel %vm886, %v650, %v878
        %v891 = vsel %vm887, %v651, %v879
        %v892 = vsel %vm888, %v652, %v880
        %v897 = vrot.slane %v869, 5
        %v898 = vrot.slane %v870, 5
        %v899 = vrot.slane %v871, 5
        %v900 = vrot.slane %v872, 5
        %v905 = vsel %vm885, 2.0, %v897
        %v906 = vsel %vm886, 2.0, %v898
        %v907 = vsel %vm887, 2.0, %v899
        %v908 = vsel %vm888, 2.0, %v900
        %v913 = vrot.slane %v889, 5
        %v914 = vrot.slane %v890, 5
        %v915 = vrot.slane %v891, 5
        %v916 = vrot.slane %v892, 5
        %vm921 = vcmp.gt.f32.partialorder %v653, %v913
        %vm922 = vcmp.gt.f32.partialorder %v654, %v914
        %vm923 = vcmp.gt.f32.partialorder %v655, %v915
        %vm924 = vcmp.gt.f32.partialorder %v656, %v916
        %v929 = vrot.slane %v905, 5
        %v930 = vrot.slane %v906, 5
        %v931 = vrot.slane %v907, 5
        %v932 = vrot.slane %v908, 5
        %v937 = vsel %vm921, 3.0, %v929
        %v938 = vsel %vm922, 3.0, %v930
        %v939 = vsel %vm923, 3.0, %v931
        %v940 = vsel %vm924, 3.0, %v932
        %941 = vst [vmem:[%s255] sm:$0x7] %v690
        %942 = vst [vmem:[%s255 + $0x8] sm:$0x7] %v692
        %943 = vst [vmem:[%s255 + $0x10] sm:$0x7] %v694
        %944 = vst [vmem:[%s255 + $0x18] sm:$0x7] %v696
        %945 = vst [vmem:[%s255] sm:$0x38] %v824
        %946 = vst [vmem:[%s255 + $0x8] sm:$0x38] %v825
        %947 = vst [vmem:[%s255 + $0x10] sm:$0x38] %v826
        %948 = vst [vmem:[%s255 + $0x18] sm:$0x38] %v827
        %949 = vst [vmem:[%s255] sm:$0xc0] %v828
        %950 = vst [vmem:[%s255 + $0x8] sm:$0xc0] %v829
        %951 = vst [vmem:[%s255 + $0x10] sm:$0xc0] %v830
        %952 = vst [vmem:[%s255 + $0x18] sm:$0xc0] %v831
        %953 = vst [vmem:[%s255 + $0x20] sm:$0x1] %v832
        %954 = vst [vmem:[%s255 + $0x28] sm:$0x1] %v833
        %955 = vst [vmem:[%s255 + $0x30] sm:$0x1] %v834
        %956 = vst [vmem:[%s255 + $0x38] sm:$0x1] %v835
        %v961 = vrot.slane %v706, 6
        %v962 = vrot.slane %v708, 6
        %v963 = vrot.slane %v710, 6
        %v964 = vrot.slane %v712, 6
        %v969 = vadd.f32 %v824, %v961
        %v970 = vadd.f32 %v825, %v962
        %v971 = vadd.f32 %v826, %v963
        %v972 = vadd.f32 %v827, %v964
        %v977 = vrot.slane %v969, 2
        %v978 = vrot.slane %v970, 2
        %v979 = vrot.slane %v971, 2
        %v980 = vrot.slane %v972, 2
        %985 = vst [vmem:[%s255 + $0x20] sm:$0xe] %v977
        %986 = vst [vmem:[%s255 + $0x28] sm:$0xe] %v978
        %987 = vst [vmem:[%s255 + $0x30] sm:$0xe] %v979
        %988 = vst [vmem:[%s255 + $0x38] sm:$0xe] %v980
        %v989 = vadd.f32 %v828, %v961
        %v990 = vadd.f32 %v829, %v962
        %v991 = vadd.f32 %v830, %v963
        %v992 = vadd.f32 %v831, %v964
        %v993 = vadd.f32 %v832, %v961
        %v994 = vadd.f32 %v833, %v962
        %v995 = vadd.f32 %v834, %v963
        %v996 = vadd.f32 %v835, %v964
        %vm1005 = vcmask 1045504
        %v1006 = vrot.slane %v989, 2
        %v1007 = vrot.slane %v993, 2
        %v1008 = vsel %vm1005, %v1006, %v1007
        %v1009 = vrot.slane %v990, 2
        %v1010 = vrot.slane %v994, 2
        %v1011 = vsel %vm1005, %v1009, %v1010
        %v1012 = vrot.slane %v991, 2
        %v1013 = vrot.slane %v995, 2
        %v1014 = vsel %vm1005, %v1012, %v1013
        %v1015 = vrot.slane %v992, 2
        %v1016 = vrot.slane %v996, 2
        %v1017 = vsel %vm1005, %v1015, %v1016
        %1022 = vst [vmem:[%s255 + $0x20] sm:$0x70] %v1008
        %1023 = vst [vmem:[%s255 + $0x28] sm:$0x70] %v1011
        %1024 = vst [vmem:[%s255 + $0x30] sm:$0x70] %v1014
        %1025 = vst [vmem:[%s255 + $0x38] sm:$0x70] %v1017
        %v1030 = vrot.slane %v937, 1
        %v1031 = vrot.slane %v938, 1
        %v1032 = vrot.slane %v939, 1
        %v1033 = vrot.slane %v940, 1
        %1038 = vst [vmem:[%s255 + $0x20] sm:$0x80] %v1030
        %1039 = vst [vmem:[%s255 + $0x28] sm:$0x80] %v1031
        %1040 = vst [vmem:[%s255 + $0x30] sm:$0x80] %v1032
        %1041 = vst [vmem:[%s255 + $0x38] sm:$0x80] %v1033
        %1042 = vst [vmem:[%s255 + $0x40] sm:$0x3] %v1030
        %1043 = vst [vmem:[%s255 + $0x48] sm:$0x3] %v1031
        %1044 = vst [vmem:[%s255 + $0x50] sm:$0x3] %v1032
        %1045 = vst [vmem:[%s255 + $0x58] sm:$0x3] %v1033
        %s1046 = sand.u32 %s143, 1
        %s1047 = sand.u32 %s143, 1
        %s1048 = smul.addr %s1047, 96
        %s1049 = scalar_lea.vmem [#allocation5], %s1048
        // Predicated region
        $region37: #{_detector_boxes.1} parent=35 // pred_check
          %p1050 = pneg %p153
        $region38: #{_detector_boxes.1} parent=35 // pred_check_branch
          %1052 = sbr.rel (%p1050) target = $region40
        $region39: #{_detector_boxes.1} parent=35 // pred_region
          %s1053 = smul.u32 4, %s27
          %s1054 = smul.addr %s1053, 8
          %s1055 = scalar_lea.vmem %s6, %s1054
          // Predicated region
          $region41: #{_detector_boxes.1} parent=39 // pred_check
            _
          $region42: #{_detector_boxes.1} parent=39 // pred_check_branch
            %1057 = sbr.rel (0) target = $region44
          $region43: #{_detector_boxes.1} parent=39 // pred_region
            // Predicated region
            $region45: #{_detector_boxes.1} parent=43 // pred_check
              _
            $region46: #{_detector_boxes.1} parent=43 // pred_check_branch
              %1059 = sbr.rel (0) target = $region48
            $region47: #{_detector_boxes.1} parent=43 // pred_region
              loop: start=0, step=1, limit=1
              $region49: #{_detector_boxes.1} parent=47 // loop_pre_header
                _
              $region50: #{_detector_boxes.1} parent=47 // loop_header
                %s1061 = sphi 0, %s1065
                %p1062 = scmp.ge.s32.totalorder %s1061, 1
                %s1066 = sphi %s1049, %s1049
                %s1067 = sphi %s1055, %s1055
              $region51: #{_detector_boxes.1} parent=47 // loop_header_branch
                %1064 = sbr.rel (%p1062) target = $region55
              $region52: #{_detector_boxes.1} parent=47 // loop_body
                %v1068 = vld [vmem:[%s1066] sm:$0xff]
                %1069 = vst [vmem:[%s1067] sm:$0xff] %v1068
                %v1070 = vld [vmem:[%s1066 + $0x8] sm:$0xff]
                %1071 = vst [vmem:[%s1067 + $0x8] sm:$0xff] %v1070
                %v1072 = vld [vmem:[%s1066 + $0x10] sm:$0xff]
                %1073 = vst [vmem:[%s1067 + $0x10] sm:$0xff] %v1072
                %v1074 = vld [vmem:[%s1066 + $0x18] sm:$0xff]
                %1075 = vst [vmem:[%s1067 + $0x18] sm:$0xff] %v1074
                %v1076 = vld [vmem:[%s1066 + $0x20] sm:$0xff]
                %1077 = vst [vmem:[%s1067 + $0x60] sm:$0xff] %v1076
                %v1078 = vld [vmem:[%s1066 + $0x28] sm:$0xff]
                %1079 = vst [vmem:[%s1067 + $0x68] sm:$0xff] %v1078
                %v1080 = vld [vmem:[%s1066 + $0x30] sm:$0xff]
                %1081 = vst [vmem:[%s1067 + $0x70] sm:$0xff] %v1080
                %v1082 = vld [vmem:[%s1066 + $0x38] sm:$0xff]
                %1083 = vst [vmem:[%s1067 + $0x78] sm:$0xff] %v1082
                %v1084 = vld [vmem:[%s1066 + $0x40] sm:$0xff]
                %1085 = vst [vmem:[%s1067 + $0xc0] sm:$0xff] %v1084
                %v1086 = vld [vmem:[%s1066 + $0x48] sm:$0xff]
                %1087 = vst [vmem:[%s1067 + $0xc8] sm:$0xff] %v1086
                %v1088 = vld [vmem:[%s1066 + $0x50] sm:$0xff]
                %1089 = vst [vmem:[%s1067 + $0xd0] sm:$0xff] %v1088
                %v1090 = vld [vmem:[%s1066 + $0x58] sm:$0xff]
                %1091 = vst [vmem:[%s1067 + $0xd8] sm:$0xff] %v1090
              $region53: #{_detector_boxes.1} parent=47 // loop_footer
                %s1065 = sadd.s32 1, %s1061
              $region54: #{_detector_boxes.1} parent=47 // loop_footer_branch
                %1060 = sbr.rel target = $region50
              $region55: #{_detector_boxes.1} parent=47 // loop_exit
                _
            $region48: #{_detector_boxes.1} parent=43 // pred_fallthru
              _
            // Predicated region
            $region56: #{_detector_boxes.1} parent=43 // pred_check
              _
            $region57: #{_detector_boxes.1} parent=43 // pred_check_branch
              %1093 = sbr.rel target = $region59
            $region58: #{_detector_boxes.1} parent=43 // pred_region
              _
            $region59: #{_detector_boxes.1} parent=43 // pred_fallthru
              _
          $region44: #{_detector_boxes.1} parent=39 // pred_fallthru
            _
          %1094 = vnop
        $region40: #{_detector_boxes.1} parent=35 // pred_fallthru
          _
      $region36: #{_detector_boxes.1} parent=5 // pred_fallthru
        _
      %p1095 = scmp.le.s32.totalorder 2, %s22
      // Predicated region
      $region60: #{_detector_boxes.1} parent=5 // pred_check
        %p1096 = pneg %p1095
      $region61: #{_detector_boxes.1} parent=5 // pred_check_branch
        %1098 = sbr.rel (%p1096) target = $region63
      $region62: #{_detector_boxes.1} parent=5 // pred_region
        %s1099 = ssub.s32 %s22, 2
        // Predicated region
        $region64: #{_detector_boxes.1} parent=62 // pred_check
          %p1100 = pneg %p159
        $region65: #{_detector_boxes.1} parent=62 // pred_check_branch
          %1102 = sbr.rel (%p1100) target = $region67
        $region66: #{_detector_boxes.1} parent=62 // pred_region
          %s1103 = sand.u32 %s144, 1
          %s1104 = sand.u32 %s144, 1
          %s1105 = smul.addr %s1104, 96
          %s1106 = scalar_lea.vmem [#allocation5], %s1105
        $region67: #{_detector_boxes.1} parent=62 // pred_fallthru
          _
      $region63: #{_detector_boxes.1} parent=5 // pred_fallthru
        _
    $region6: #{_detector_boxes.1} parent=1 // loop_footer
      %s26 = sadd.s32 1, %s22
    $region7: #{_detector_boxes.1} parent=1 // loop_footer_branch
      %21 = sbr.rel target = $region3
    $region8: #{_detector_boxes.1} parent=1 // loop_exit
      _

</llo_original>
